<compile_context>
chip_gen: v5e
topology: v5e:2x2
jax: 0.10.0
libtpu: 0.0.40
codegen_flags: <defaults>
</compile_context>

<pallas_src>
import jax
import jax.numpy as jnp
from jax.experimental import pallas as pl
from jax.experimental.pallas import tpu as pltpu

D_DF = 4
C_IN = D_DF * 8      # 32 input channels
KS = 4               # kernel size == stride
TM_MAX = 4096        # patches per tile; (512, 4096) bf16 tile = 4 MiB per buffer


def _logit_kernel(x_ref, w_ref, b_ref, o_ref):
    # x_ref: [Kdim, TM] bf16 patches^T (VMEM), w_ref: [1, Kdim] bf16 flattened
    # conv weight (VMEM, resident), b_ref: [1] f32 bias (SMEM scalar),
    # o_ref: [1, TM] f32 logits (lane-dense).
    acc = jnp.dot(w_ref[...], x_ref[...], preferred_element_type=jnp.float32)
    o_ref[...] = acc + b_ref[0]


@jax.jit
def logit_block(h, w, b):
    """h: [N, C, H, W] f32 (NCHW), w: [1, C, KS, KS], b: [1] -> [N, 1, H//KS, W//KS]."""
    N, C, H, W = h.shape
    OH, OW = H // KS, W // KS
    # Match Conv2d(stride=4, VALID) semantics: floor-crop any spatial remainder.
    h = h[:, :, :OH * KS, :OW * KS]

    M = N * OH * OW
    Kdim = C * KS * KS

    # im2col, transposed so the patch index M sits on the lane (last) axis.
    # Feature order (c, kh, kw) matches the flattened OIHW conv weight.
    pt = h.reshape(N, C, OH, KS, OW, KS)
    pt = jnp.transpose(pt, (1, 3, 5, 0, 2, 4)).reshape(Kdim, M).astype(jnp.bfloat16)
    w_flat = w.reshape(1, Kdim).astype(jnp.bfloat16)
    b = b.astype(jnp.float32)

    # Tile M; a single full-extent block when M is small (lane-divisibility is
    # satisfied either because tm % 128 == 0 or tm == M == full extent).
    tm = M if M <= TM_MAX else TM_MAX
    grid = (pl.cdiv(M, tm),)

    cost = pl.CostEstimate(
        flops=2 * M * Kdim,
        transcendentals=0,
        bytes_accessed=Kdim * M * 2 + Kdim * 2 + M * 4 + 4,
    )

    out = pl.pallas_call(
        _logit_kernel,
        out_shape=jax.ShapeDtypeStruct((1, M), jnp.float32),
        grid_spec=pl.GridSpec(
            grid=grid,
            in_specs=[
                pl.BlockSpec((Kdim, tm), lambda i: (0, i)),   # patches^T tile
                pl.BlockSpec((1, Kdim), lambda i: (0, 0)),    # weight, resident
                pl.BlockSpec(memory_space=pltpu.SMEM),        # bias scalar
            ],
            out_specs=pl.BlockSpec((1, tm), lambda i: (0, i)),
        ),
        compiler_params=pltpu.CompilerParams(
            dimension_semantics=("parallel",),
            # Fuse the im2col reshape/transpose/bf16-cast into the input DMA.
            allow_input_fusion=[True, False, False],
        ),
        cost_estimate=cost,
    )(pt, w_flat, b)

    # Columns are ordered (n, oh, ow) -> conv output layout [N, 1, OH, OW].
    return out.reshape(N, 1, OH, OW)


def _reference_conv(h, w, b):
    out = jax.lax.conv_general_dilated(
        h, w, window_strides=(KS, KS), padding="VALID",
        dimension_numbers=("NCHW", "OIHW", "NCHW"))
    return out + b.reshape(1, 1, 1, 1)


if __name__ == "__main__":
    key = jax.random.PRNGKey(0)
    k_h, k_w, k_b = jax.random.split(key, 3)

    # Small shapes consistent with the module: N=2, C=D_DF*8=32, 8x8 -> 2x2 output.
    h = jax.random.normal(k_h, (2, C_IN, 8, 8), dtype=jnp.float32)
    # Deterministic synthetic parameters (Conv2d(32, 1, 4, stride=4) shapes).
    w = jax.random.normal(k_w, (1, C_IN, KS, KS), dtype=jnp.float32) * 0.05
    b = jax.random.normal(k_b, (1,), dtype=jnp.float32) * 0.05

    out = jax.block_until_ready(logit_block(h, w, b))
    ref = jax.block_until_ready(_reference_conv(h, w, b))

    assert out.shape == (2, 1, 2, 2), out.shape
    # bf16 inputs / f32 accumulation: allow quantization-level error vs f32 reference.
    err = float(jnp.max(jnp.abs(out - ref)))
    assert err < 5e-2, f"mismatch vs reference conv: max abs err {err}"
    print("KERNEL_OK")
</pallas_src>

<mosaic_0001>
module attributes {stable_mosaic.version = 11 : i64} {
  func.func @_logit_kernel(%arg0: i32, %arg1: memref<512x8xbf16, #tpu.memory_space<vmem>>, %arg2: memref<1x512xbf16, #tpu.memory_space<vmem>>, %arg3: memref<1xf32, #tpu.memory_space<smem>>, %arg4: memref<1x8xf32, #tpu.memory_space<vmem>>) attributes {dimension_semantics = [#tpu.dimension_semantics<parallel>], iteration_bounds = array<i64: 1>, scalar_prefetch = 0 : i64, scratch_operands = 0 : i64, tpu.core_type = #tpu.core_type<tc>, window_params = [{transform_indices = @transform_0, window_bounds = array<i64: 512, 8>}, {pipeline_mode = #tpu.pipeline_mode<synchronous>, transform_indices = @transform_1, window_bounds = array<i64: 1, 512>}, {transform_indices = @transform_2, window_bounds = array<i64: 1>}, {transform_indices = @transform_3, window_bounds = array<i64: 1, 8>}]} {
    %c0 = arith.constant 0 : index
    %c0_0 = arith.constant 0 : index
    %0 = vector.load %arg2[%c0, %c0_0] : memref<1x512xbf16, #tpu.memory_space<vmem>>, vector<1x512xbf16>
    %c0_1 = arith.constant 0 : index
    %c0_2 = arith.constant 0 : index
    %1 = vector.load %arg1[%c0_1, %c0_2] : memref<512x8xbf16, #tpu.memory_space<vmem>>, vector<512x8xbf16>
    %cst = arith.constant dense<0.000000e+00> : vector<1x8xf32>
    %2 = tpu.matmul %0, %1, %cst {dimension_numbers = #tpu.dot_dimension_numbers<[1], [0], [0], [1], [0, 0, 1, 1], [], []>} : vector<1x512xbf16>, vector<512x8xbf16>, vector<1x8xf32> -> vector<1x8xf32>
    %c0_3 = arith.constant 0 : index
    %3 = memref.load %arg3[%c0_3] : memref<1xf32, #tpu.memory_space<smem>>
    %4 = vector.broadcast %3 : f32 to vector<1x8xf32>
    %5 = arith.addf %2, %4 : vector<1x8xf32>
    %c0_4 = arith.constant 0 : index
    %c0_5 = arith.constant 0 : index
    %6 = vector.load %arg4[%c0_4, %c0_5] : memref<1x8xf32, #tpu.memory_space<vmem>>, vector<1x8xf32>
    tpu.vector_store %arg4[%c0_4, %c0_5], %5 {strides = array<i32>} : memref<1x8xf32, #tpu.memory_space<vmem>>, vector<1x8xf32>,
    return
  }
  func.func @transform_0(%arg0: i32) -> (i32, i32) {
    %c0_i32 = arith.constant 0 : i32
    %c0_i32_0 = arith.constant 0 : i32
    return %c0_i32, %arg0 : i32, i32
  }
  func.func @transform_1(%arg0: i32) -> (i32, i32) {
    %c0_i32 = arith.constant 0 : i32
    %c0_i32_0 = arith.constant 0 : i32
    %c0_i32_1 = arith.constant 0 : i32
    return %c0_i32, %c0_i32_0 : i32, i32
  }
  func.func @transform_2(%arg0: i32) -> i32 {
    %c0_i32 = arith.constant 0 : i32
    %c0_i32_0 = arith.constant 0 : i32
    return %c0_i32 : i32
  }
  func.func @transform_3(%arg0: i32) -> (i32, i32) {
    %c0_i32 = arith.constant 0 : i32
    %c0_i32_0 = arith.constant 0 : i32
    return %c0_i32, %arg0 : i32, i32
  }
}

</mosaic_0001>

<llo_original>
// kernel: logit_block.1
$region0: #{logit_block.1}
  #allocation0 [shape = 'u32[]', space=smem, size = 0x4, offset = 0x4, fixed_abs, tag = 'smem constant byte address 0x4 - core index']
  #allocation1 [shape = 'u32[72,128]{1,0:T(1,128)}', space=vmem, size = 0x9000, scoped, tag = 'internal scratch']
  #allocation2 [shape = 'f32[1]{0:T(128)S(6)}', space=smem, size = 0x200, scoped, tag = 'scoped memory for logit_block.1']
  %s0 = inlined_call_operand.vmem [shape: bf16[512,8], index: 0, kind: input, shape index: {}]
  %s1 = inlined_call_operand.vmem [shape: bf16[1,512], index: 1, kind: input, shape index: {}]
  %s2 = inlined_call_operand.<no memory space> [shape: f32[1], index: 2, kind: input, shape index: {}]
  %s3 = inlined_call_operand.vmem [shape: f32[1,8], index: 3, kind: output, shape index: {}]
  %s4 = sld [smem:[#allocation0]]
  $region22: #{logit_block.1} parent=0
    _
  %s6 = ssub.s32 1, %s4
  %s7 = scalar_select 0, %s6, %s4
  %8 = sst [smem:[#allocation2]] %s2
  // Predicated region
  $region2: #{logit_block.1} parent=0 // pred_check
    _
  $region3: #{logit_block.1} parent=0 // pred_check_branch
    %10 = sbr.rel (0) target = $region5
  $region4: #{logit_block.1} parent=0 // pred_region
    _
  $region5: #{logit_block.1} parent=0 // pred_fallthru
    _
  // Predicated region
  $region6: #{logit_block.1} parent=0 // pred_check
    _
  $region7: #{logit_block.1} parent=0 // pred_check_branch
    %12 = sbr.rel (0) target = $region9
  $region8: #{logit_block.1} parent=0 // pred_region
    _
  $region9: #{logit_block.1} parent=0 // pred_fallthru
    _
  // Predicated region
  $region10: #{logit_block.1} parent=0 // pred_check
    _
  $region11: #{logit_block.1} parent=0 // pred_check_branch
    %14 = sbr.rel (0) target = $region13
  $region12: #{logit_block.1} parent=0 // pred_region
    _
  $region13: #{logit_block.1} parent=0 // pred_fallthru
    _
  %v15 = vld [vmem:[%s1] sm:$0xf]
  %v16 = vld [vmem:[%s0] sm:$0xf]
  %v17 = vld [vmem:[%s0 + $0x4] sm:$0xf]
  %v18 = vld [vmem:[%s0 + $0x8] sm:$0xf]
  %v19 = vld [vmem:[%s0 + $0xc] sm:$0xf]
  %v20 = vld [vmem:[%s0 + $0x10] sm:$0xf]
  %v21 = vld [vmem:[%s0 + $0x14] sm:$0xf]
  %v22 = vld [vmem:[%s0 + $0x18] sm:$0xf]
  %v23 = vld [vmem:[%s0 + $0x1c] sm:$0xf]
  %v24 = vld [vmem:[%s0 + $0x20] sm:$0xf]
  %v25 = vld [vmem:[%s0 + $0x24] sm:$0xf]
  %v26 = vld [vmem:[%s0 + $0x28] sm:$0xf]
  %v27 = vld [vmem:[%s0 + $0x2c] sm:$0xf]
  %v28 = vld [vmem:[%s0 + $0x30] sm:$0xf]
  %v29 = vld [vmem:[%s0 + $0x34] sm:$0xf]
  %v30 = vld [vmem:[%s0 + $0x38] sm:$0xf]
  %v31 = vld [vmem:[%s0 + $0x3c] sm:$0xf]
  %v32 = vld [vmem:[%s0 + $0x40] sm:$0xf]
  %v33 = vld [vmem:[%s0 + $0x44] sm:$0xf]
  %v34 = vld [vmem:[%s0 + $0x48] sm:$0xf]
  %v35 = vld [vmem:[%s0 + $0x4c] sm:$0xf]
  %v36 = vld [vmem:[%s0 + $0x50] sm:$0xf]
  %v37 = vld [vmem:[%s0 + $0x54] sm:$0xf]
  %v38 = vld [vmem:[%s0 + $0x58] sm:$0xf]
  %v39 = vld [vmem:[%s0 + $0x5c] sm:$0xf]
  %v40 = vld [vmem:[%s0 + $0x60] sm:$0xf]
  %v41 = vld [vmem:[%s0 + $0x64] sm:$0xf]
  %v42 = vld [vmem:[%s0 + $0x68] sm:$0xf]
  %v43 = vld [vmem:[%s0 + $0x6c] sm:$0xf]
  %v44 = vld [vmem:[%s0 + $0x70] sm:$0xf]
  %v45 = vld [vmem:[%s0 + $0x74] sm:$0xf]
  %v46 = vld [vmem:[%s0 + $0x78] sm:$0xf]
  %v47 = vld [vmem:[%s0 + $0x7c] sm:$0xf]
  %v48 = vld [vmem:[%s0 + $0x80] sm:$0xf]
  %v49 = vld [vmem:[%s0 + $0x84] sm:$0xf]
  %v50 = vld [vmem:[%s0 + $0x88] sm:$0xf]
  %v51 = vld [vmem:[%s0 + $0x8c] sm:$0xf]
  %v52 = vld [vmem:[%s0 + $0x90] sm:$0xf]
  %v53 = vld [vmem:[%s0 + $0x94] sm:$0xf]
  %v54 = vld [vmem:[%s0 + $0x98] sm:$0xf]
  %v55 = vld [vmem:[%s0 + $0x9c] sm:$0xf]
  %v56 = vld [vmem:[%s0 + $0xa0] sm:$0xf]
  %v57 = vld [vmem:[%s0 + $0xa4] sm:$0xf]
  %v58 = vld [vmem:[%s0 + $0xa8] sm:$0xf]
  %v59 = vld [vmem:[%s0 + $0xac] sm:$0xf]
  %v60 = vld [vmem:[%s0 + $0xb0] sm:$0xf]
  %v61 = vld [vmem:[%s0 + $0xb4] sm:$0xf]
  %v62 = vld [vmem:[%s0 + $0xb8] sm:$0xf]
  %v63 = vld [vmem:[%s0 + $0xbc] sm:$0xf]
  %v64 = vld [vmem:[%s0 + $0xc0] sm:$0xf]
  %v65 = vld [vmem:[%s0 + $0xc4] sm:$0xf]
  %v66 = vld [vmem:[%s0 + $0xc8] sm:$0xf]
  %v67 = vld [vmem:[%s0 + $0xcc] sm:$0xf]
  %v68 = vld [vmem:[%s0 + $0xd0] sm:$0xf]
  %v69 = vld [vmem:[%s0 + $0xd4] sm:$0xf]
  %v70 = vld [vmem:[%s0 + $0xd8] sm:$0xf]
  %v71 = vld [vmem:[%s0 + $0xdc] sm:$0xf]
  %v72 = vld [vmem:[%s0 + $0xe0] sm:$0xf]
  %v73 = vld [vmem:[%s0 + $0xe4] sm:$0xf]
  %v74 = vld [vmem:[%s0 + $0xe8] sm:$0xf]
  %v75 = vld [vmem:[%s0 + $0xec] sm:$0xf]
  %v76 = vld [vmem:[%s0 + $0xf0] sm:$0xf]
  %v77 = vld [vmem:[%s0 + $0xf4] sm:$0xf]
  %v78 = vld [vmem:[%s0 + $0xf8] sm:$0xf]
  %v79 = vld [vmem:[%s0 + $0xfc] sm:$0xf]
  %s80 = sld [smem:[#allocation2]]
  %v81 = vstv %s80
  %83 = vst [vmem:[#allocation1] ss:$9 sm:$0xff] %v15
  %v84 = vld [vmem:[#allocation1] sm:$0xff]
  %v85 = vld [vmem:[#allocation1 + $0x9] sm:$0xff]
  %v86 = vld [vmem:[#allocation1 + $0x12] sm:$0xff]
  %v87 = vld [vmem:[#allocation1 + $0x1b] sm:$0xff]
  %v156 = vunpack.c.l.b16 %v16
  %v157 = vunpack.c.l.b16 %v17
  %v158 = vunpack.c.l.b16 %v18
  %v159 = vunpack.c.l.b16 %v19
  %v160 = vunpack.c.l.b16 %v20
  %v161 = vunpack.c.l.b16 %v21
  %v162 = vunpack.c.l.b16 %v22
  %v163 = vunpack.c.l.b16 %v23
  %v164 = vunpack.c.l.b16 %v24
  %v165 = vunpack.c.l.b16 %v25
  %v166 = vunpack.c.l.b16 %v26
  %v167 = vunpack.c.l.b16 %v27
  %v168 = vunpack.c.l.b16 %v28
  %v169 = vunpack.c.l.b16 %v29
  %v170 = vunpack.c.l.b16 %v30
  %v171 = vunpack.c.l.b16 %v31
  %v172 = vunpack.c.l.b16 %v32
  %v173 = vunpack.c.l.b16 %v33
  %v174 = vunpack.c.l.b16 %v34
  %v175 = vunpack.c.l.b16 %v35
  %v176 = vunpack.c.l.b16 %v36
  %v177 = vunpack.c.l.b16 %v37
  %v178 = vunpack.c.l.b16 %v38
  %v179 = vunpack.c.l.b16 %v39
  %v180 = vunpack.c.l.b16 %v40
  %v181 = vunpack.c.l.b16 %v41
  %v182 = vunpack.c.l.b16 %v42
  %v183 = vunpack.c.l.b16 %v43
  %v184 = vunpack.c.l.b16 %v44
  %v185 = vunpack.c.l.b16 %v45
  %v186 = vunpack.c.l.b16 %v46
  %v187 = vunpack.c.l.b16 %v47
  %v188 = vunpack.c.l.b16 %v48
  %v189 = vunpack.c.l.b16 %v49
  %v190 = vunpack.c.l.b16 %v50
  %v191 = vunpack.c.l.b16 %v51
  %v192 = vunpack.c.l.b16 %v52
  %v193 = vunpack.c.l.b16 %v53
  %v194 = vunpack.c.l.b16 %v54
  %v195 = vunpack.c.l.b16 %v55
  %v196 = vunpack.c.l.b16 %v56
  %v197 = vunpack.c.l.b16 %v57
  %v198 = vunpack.c.l.b16 %v58
  %v199 = vunpack.c.l.b16 %v59
  %v200 = vunpack.c.l.b16 %v60
  %v201 = vunpack.c.l.b16 %v61
  %v202 = vunpack.c.l.b16 %v62
  %v203 = vunpack.c.l.b16 %v63
  %v204 = vunpack.c.l.b16 %v64
  %v205 = vunpack.c.l.b16 %v65
  %v206 = vunpack.c.l.b16 %v66
  %v207 = vunpack.c.l.b16 %v67
  %v208 = vunpack.c.l.b16 %v68
  %v209 = vunpack.c.l.b16 %v69
  %v210 = vunpack.c.l.b16 %v70
  %v211 = vunpack.c.l.b16 %v71
  %v212 = vunpack.c.l.b16 %v72
  %v213 = vunpack.c.l.b16 %v73
  %v214 = vunpack.c.l.b16 %v74
  %v215 = vunpack.c.l.b16 %v75
  %v216 = vunpack.c.l.b16 %v76
  %v217 = vunpack.c.l.b16 %v77
  %v218 = vunpack.c.l.b16 %v78
  %v219 = vunpack.c.l.b16 %v79
  %v220 = vpack.c.b16 %v157, %v156
  %v221 = vpack.c.b16 %v159, %v158
  %v222 = vpack.c.b16 %v161, %v160
  %v223 = vpack.c.b16 %v163, %v162
  %v224 = vpack.c.b16 %v165, %v164
  %v225 = vpack.c.b16 %v167, %v166
  %v226 = vpack.c.b16 %v169, %v168
  %v227 = vpack.c.b16 %v171, %v170
  %v228 = vpack.c.b16 %v173, %v172
  %v229 = vpack.c.b16 %v175, %v174
  %v230 = vpack.c.b16 %v177, %v176
  %v231 = vpack.c.b16 %v179, %v178
  %v232 = vpack.c.b16 %v181, %v180
  %v233 = vpack.c.b16 %v183, %v182
  %v234 = vpack.c.b16 %v185, %v184
  %v235 = vpack.c.b16 %v187, %v186
  %v236 = vpack.c.b16 %v189, %v188
  %v237 = vpack.c.b16 %v191, %v190
  %v238 = vpack.c.b16 %v193, %v192
  %v239 = vpack.c.b16 %v195, %v194
  %v240 = vpack.c.b16 %v197, %v196
  %v241 = vpack.c.b16 %v199, %v198
  %v242 = vpack.c.b16 %v201, %v200
  %v243 = vpack.c.b16 %v203, %v202
  %v244 = vpack.c.b16 %v205, %v204
  %v245 = vpack.c.b16 %v207, %v206
  %v246 = vpack.c.b16 %v209, %v208
  %v247 = vpack.c.b16 %v211, %v210
  %v248 = vpack.c.b16 %v213, %v212
  %v249 = vpack.c.b16 %v215, %v214
  %v250 = vpack.c.b16 %v217, %v216
  %v251 = vpack.c.b16 %v219, %v218
  %284 = vmatpush.bf16.msra.mxu0 %v227
  %285 = vmatpush.bf16.msra.mxu0 %v226
  %286 = vmatpush.bf16.msra.mxu0 %v225
  %287 = vmatpush.bf16.msra.mxu0 %v224
  %288 = vmatpush.bf16.msra.mxu0 %v223
  %289 = vmatpush.bf16.msra.mxu0 %v222
  %290 = vmatpush.bf16.msra.mxu0 %v221
  %291 = vmatpush.bf16.msra.mxu0 %v220
  %292 = vmatmul.bf16.gmra.mxu0 %v84
  %v293 = vpop.f32.mrf.mxu0
  %v294 = vadd.f32 %v81, %v293
  %v295 = vpop.f32.mrf.mxu0
  %296 = vdwg.mxu0
  %297 = vmatpush.bf16.msra.mxu0 %v235
  %298 = vmatpush.bf16.msra.mxu0 %v234
  %299 = vmatpush.bf16.msra.mxu0 %v233
  %300 = vmatpush.bf16.msra.mxu0 %v232
  %301 = vmatpush.bf16.msra.mxu0 %v231
  %302 = vmatpush.bf16.msra.mxu0 %v230
  %303 = vmatpush.bf16.msra.mxu0 %v229
  %304 = vmatpush.bf16.msra.mxu0 %v228
  %305 = vmatmul.bf16.gmra.mxu0 %v85
  %v306 = vpop.f32.mrf.mxu0
  %v307 = vadd.f32 %v294, %v306
  %v308 = vpop.f32.mrf.mxu0
  %309 = vdwg.mxu0
  %310 = vmatpush.bf16.msra.mxu0 %v243
  %311 = vmatpush.bf16.msra.mxu0 %v242
  %312 = vmatpush.bf16.msra.mxu0 %v241
  %313 = vmatpush.bf16.msra.mxu0 %v240
  %314 = vmatpush.bf16.msra.mxu0 %v239
  %315 = vmatpush.bf16.msra.mxu0 %v238
  %316 = vmatpush.bf16.msra.mxu0 %v237
  %317 = vmatpush.bf16.msra.mxu0 %v236
  %318 = vmatmul.bf16.gmra.mxu0 %v86
  %v319 = vpop.f32.mrf.mxu0
  %v320 = vadd.f32 %v307, %v319
  %v321 = vpop.f32.mrf.mxu0
  %322 = vdwg.mxu0
  %323 = vmatpush.bf16.msra.mxu0 %v251
  %324 = vmatpush.bf16.msra.mxu0 %v250
  %325 = vmatpush.bf16.msra.mxu0 %v249
  %326 = vmatpush.bf16.msra.mxu0 %v248
  %327 = vmatpush.bf16.msra.mxu0 %v247
  %328 = vmatpush.bf16.msra.mxu0 %v246
  %329 = vmatpush.bf16.msra.mxu0 %v245
  %330 = vmatpush.bf16.msra.mxu0 %v244
  %331 = vmatmul.bf16.gmra.mxu0 %v87
  %v332 = vpop.f32.mrf.mxu0
  %v333 = vadd.f32 %v320, %v332
  %v334 = vpop.f32.mrf.mxu0
  %335 = vdwg.mxu0
  %vm336 = vcmask 57344
  %337 = vst.msk [vmem:[%s3] sm:$0x1] %vm336, %v333
  // Predicated region
  $region14: #{logit_block.1} parent=0 // pred_check
    _
  $region15: #{logit_block.1} parent=0 // pred_check_branch
    %339 = sbr.rel (0) target = $region17
  $region16: #{logit_block.1} parent=0 // pred_region
    _
  $region17: #{logit_block.1} parent=0 // pred_fallthru
    _
  // Predicated region
  $region18: #{logit_block.1} parent=0 // pred_check
    _
  $region19: #{logit_block.1} parent=0 // pred_check_branch
    %341 = sbr.rel (0) target = $region21
  $region20: #{logit_block.1} parent=0 // pred_region
    _
  $region21: #{logit_block.1} parent=0 // pred_fallthru
    _

</llo_original>
